<compile_context>
chip_gen: v5e
topology: v5e:2x2
jax: 0.10.0
libtpu: 0.0.40
codegen_flags: <defaults>
</compile_context>

<pallas_src>
import functools

import jax
import jax.numpy as jnp
from jax import lax
from jax.experimental import pallas as pl
from jax.experimental.pallas import tpu as pltpu

LANES = 128
SUBLANES = 8
DEFAULT_BLOCK_ROWS = 2048  # (2048, 128) f32 tile = 1 MiB per input per buffer.


def _round_up(a: int, b: int) -> int:
    return ((a + b - 1) // b) * b


def _bce_kernel(x_ref, y_ref, out_ref, acc_loss, acc_mask, *,
                n_valid: int, block_rows: int, inner_steps: int, need_mask: bool):
    o = pl.program_id(0)          # core-split index ("parallel")
    i = pl.program_id(1)          # reduction step   ("arbitrary")

    @pl.when(i == 0)
    def _():
        acc_loss[...] = jnp.zeros_like(acc_loss)
        acc_mask[...] = jnp.zeros_like(acc_mask)

    # Cast in-kernel; inputs stream from HBM in their native dtype.
    x = x_ref[...].astype(jnp.float32)
    y = y_ref[...].astype(jnp.float32)

    valid = y >= 0.0
    if need_mask:
        # Global element index of every entry in this (possibly duplicated /
        # partially out-of-bounds) block. Elements >= n_valid (padding, garbage
        # rows of a partial block, or clamped duplicate blocks) contribute 0.
        # NOTE: int32 index math limits n to < 2^31 elements (plenty for a loss).
        row = lax.broadcasted_iota(jnp.int32, (block_rows, LANES), 0)
        lane = lax.broadcasted_iota(jnp.int32, (block_rows, LANES), 1)
        s = o * inner_steps + i                       # logical (unclamped) block id
        gidx = (s * block_rows + row) * LANES + lane
        valid = valid & (gidx < n_valid)

    # BCEWithLogitsLoss (reduction='none'), numerically stable form:
    #   max(x, 0) - x*y + log(1 + exp(-|x|))
    loss = jnp.maximum(x, 0.0) - x * y + jnp.log1p(jnp.exp(-jnp.abs(x)))
    loss = jnp.where(valid, loss, 0.0)                # where => garbage never leaks
    msk = valid.astype(jnp.float32)

    # Fold (block_rows,128) -> (8,128) with pure VPU adds; no cross-lane reduce
    # in the hot loop.
    acc_loss[...] += loss.reshape(-1, SUBLANES, LANES).sum(axis=0)
    acc_mask[...] += msk.reshape(-1, SUBLANES, LANES).sum(axis=0)

    @pl.when(i == pl.num_programs(1) - 1)
    def _():
        out_ref[0, 0] = acc_loss[...]
        out_ref[0, 1] = acc_mask[...]


@functools.partial(jax.jit, static_argnames=("block_rows",))
def bce_loss_for_token_classification(outputs: jax.Array, labels: jax.Array, *,
                                      block_rows: int = DEFAULT_BLOCK_ROWS) -> jax.Array:
    """Masked mean BCE-with-logits over tokens with label >= 0 (mask = labels >= 0)."""
    x = outputs.reshape(-1)                 # native dtype, reshape is free
    y = labels.reshape(-1)
    n = x.shape[0]

    # Pad only when n is not already a multiple of one (8,128) granule (static
    # Python branch => zero cost for aligned sizes). Pad values are irrelevant:
    # the in-kernel element mask discards them.
    n_pad = _round_up(n, SUBLANES * LANES)
    if n_pad != n:
        x = jnp.pad(x, (0, n_pad - n))
        y = jnp.pad(y, (0, n_pad - n))
    rows = n_pad // LANES                   # multiple of 8

    block_rows = min(_round_up(max(block_rows, SUBLANES), SUBLANES), rows)
    total_blocks = pl.cdiv(rows, block_rows)
    num_splits = 2 if total_blocks >= 2 else 1      # 2-TC split (v7x); no-op on 1-TC chips
    inner_steps = pl.cdiv(total_blocks, num_splits)
    # If the grid covers exactly n elements there is nothing to mask besides labels.
    need_mask = (num_splits * inner_steps * block_rows * LANES) != n

    x2 = x.reshape(rows, LANES)
    y2 = y.reshape(rows, LANES)

    def block_index(o, i):
        # Clamp so duplicate steps of the last core re-read a valid block; their
        # contribution is zeroed by the in-kernel element mask.
        return jnp.minimum(o * inner_steps + i, total_blocks - 1)

    kernel = functools.partial(
        _bce_kernel,
        n_valid=n,
        block_rows=block_rows,
        inner_steps=inner_steps,
        need_mask=need_mask,
    )

    partials = pl.pallas_call(
        kernel,
        out_shape=jax.ShapeDtypeStruct((num_splits, 2, SUBLANES, LANES), jnp.float32),
        grid_spec=pltpu.PrefetchScalarGridSpec(
            num_scalar_prefetch=0,
            grid=(num_splits, inner_steps),
            in_specs=[
                pl.BlockSpec((block_rows, LANES), lambda o, i: (block_index(o, i), 0)),
                pl.BlockSpec((block_rows, LANES), lambda o, i: (block_index(o, i), 0)),
            ],
            out_specs=pl.BlockSpec((1, 2, SUBLANES, LANES), lambda o, i: (o, 0, 0, 0)),
            scratch_shapes=[
                pltpu.VMEM((SUBLANES, LANES), jnp.float32),   # loss partials
                pltpu.VMEM((SUBLANES, LANES), jnp.float32),   # mask-count partials
            ],
        ),
        compiler_params=pltpu.CompilerParams(
            dimension_semantics=("parallel", "arbitrary")),
    )(x2, y2)

    # Single tiny cross-lane reduce + combine of per-core partials, then divide.
    loss_sum = jnp.sum(partials[:, 0])
    mask_sum = jnp.sum(partials[:, 1])
    # Note: if no label >= 0 this is 0/0 = NaN, matching the naive PyTorch formula.
    return loss_sum / mask_sum


def _reference(outputs, labels):
    x = outputs.reshape(-1).astype(jnp.float32)
    y = labels.reshape(-1).astype(jnp.float32)
    mask = (y >= 0.0).astype(jnp.float32)
    loss = jnp.maximum(x, 0.0) - x * y + jnp.log1p(jnp.exp(-jnp.abs(x)))
    return jnp.sum(loss * mask) / jnp.sum(mask)


if __name__ == "__main__":
    key = jax.random.PRNGKey(0)
    k1, k2, k3, k4, k5, k6 = jax.random.split(key, 6)

    # Case 1: tiny token-classification batch (batch=2, seq=8), f32 logits,
    # float labels with -100 "ignore" positions.
    b1, s1 = 2, 8
    out1 = jax.random.normal(k1, (b1, s1), dtype=jnp.float32)
    lab1 = jax.random.bernoulli(k2, 0.5, (b1, s1)).astype(jnp.float32)
    ign1 = jax.random.bernoulli(k3, 0.25, (b1, s1))
    lab1 = jnp.where(ign1, jnp.float32(-100.0), lab1)

    got1 = bce_loss_for_token_classification(out1, lab1)
    jax.block_until_ready(got1)
    ref1 = _reference(out1, lab1)
    assert jnp.allclose(got1, ref1, rtol=1e-5, atol=1e-5), (got1, ref1)

    # Case 2: bf16 logits + int32 labels, unaligned length, tiny block override to
    # exercise multi-block accumulation, the 2-way core split, clamped duplicate
    # blocks, and the ragged-tail mask.
    b2, s2 = 4, 520
    out2 = jax.random.normal(k4, (b2, s2), dtype=jnp.float32).astype(jnp.bfloat16)
    lab2 = jax.random.bernoulli(k5, 0.5, (b2, s2)).astype(jnp.int32)
    ign2 = jax.random.bernoulli(k6, 0.25, (b2, s2))
    lab2 = jnp.where(ign2, jnp.int32(-100), lab2)

    got2 = bce_loss_for_token_classification(out2, lab2, block_rows=8)
    jax.block_until_ready(got2)
    ref2 = _reference(out2, lab2)
    assert jnp.allclose(got2, ref2, rtol=1e-5, atol=1e-5), (got2, ref2)

    print("KERNEL_OK")
</pallas_src>

<mosaic_0001>
module attributes {stable_mosaic.version = 11 : i64} {
  func.func @_bce_kernel(%arg0: i32, %arg1: i32, %arg2: memref<8x128xf32, #tpu.memory_space<vmem>>, %arg3: memref<8x128xf32, #tpu.memory_space<vmem>>, %arg4: memref<1x2x8x128xf32, #tpu.memory_space<vmem>>, %arg5: memref<8x128xf32, #tpu.memory_space<vmem>>, %arg6: memref<8x128xf32, #tpu.memory_space<vmem>>) attributes {dimension_semantics = [#tpu.dimension_semantics<parallel>, #tpu.dimension_semantics<arbitrary>], iteration_bounds = array<i64: 1, 1>, scalar_prefetch = 0 : i64, scratch_operands = 2 : i64, tpu.core_type = #tpu.core_type<tc>, window_params = [{transform_indices = @transform_0, window_bounds = array<i64: 8, 128>}, {transform_indices = @transform_1, window_bounds = array<i64: 8, 128>}, {transform_indices = @transform_2, window_bounds = array<i64: 1, 2, 8, 128>}]} {
    %c0_i32 = arith.constant 0 : i32
    %0 = arith.cmpi eq, %arg1, %c0_i32 : i32
    %1 = arith.extui %0 : i1 to i32
    %c0_i32_0 = arith.constant 0 : i32
    %2 = arith.cmpi ne, %1, %c0_i32_0 : i32
    scf.if %2 {
      %cst_19 = arith.constant 0.000000e+00 : f32
      %47 = vector.broadcast %cst_19 : f32 to vector<8x128xf32>
      %c0_20 = arith.constant 0 : index
      %c0_21 = arith.constant 0 : index
      %48 = vector.load %arg5[%c0_20, %c0_21] : memref<8x128xf32, #tpu.memory_space<vmem>>, vector<8x128xf32>
      tpu.vector_store %arg5[%c0_20, %c0_21], %47 {strides = array<i32>} : memref<8x128xf32, #tpu.memory_space<vmem>>, vector<8x128xf32>,
      %cst_22 = arith.constant 0.000000e+00 : f32
      %49 = vector.broadcast %cst_22 : f32 to vector<8x128xf32>
      %c0_23 = arith.constant 0 : index
      %c0_24 = arith.constant 0 : index
      %50 = vector.load %arg6[%c0_23, %c0_24] : memref<8x128xf32, #tpu.memory_space<vmem>>, vector<8x128xf32>
      tpu.vector_store %arg6[%c0_23, %c0_24], %49 {strides = array<i32>} : memref<8x128xf32, #tpu.memory_space<vmem>>, vector<8x128xf32>,
    } else {
    }
    %c0 = arith.constant 0 : index
    %c0_1 = arith.constant 0 : index
    %3 = vector.load %arg2[%c0, %c0_1] : memref<8x128xf32, #tpu.memory_space<vmem>>, vector<8x128xf32>
    %c0_2 = arith.constant 0 : index
    %c0_3 = arith.constant 0 : index
    %4 = vector.load %arg3[%c0_2, %c0_3] : memref<8x128xf32, #tpu.memory_space<vmem>>, vector<8x128xf32>
    %cst = arith.constant 0.000000e+00 : f32
    %5 = vector.broadcast %cst : f32 to vector<8x128xf32>
    %6 = arith.cmpf oge, %4, %5 : vector<8x128xf32>
    %7 = tpu.iota {dimensions = array<i32: 0>} : vector<8x128xi32>
    %8 = tpu.iota {dimensions = array<i32: 1>} : vector<8x128xi32>
    %c1_i32 = arith.constant 1 : i32
    %9 = arith.muli %arg0, %c1_i32 : i32
    %10 = arith.addi %9, %arg1 : i32
    %c8_i32 = arith.constant 8 : i32
    %11 = arith.muli %10, %c8_i32 : i32
    %12 = vector.broadcast %11 : i32 to vector<8x128xi32>
    %13 = arith.addi %12, %7 : vector<8x128xi32>
    %c128_i32 = arith.constant 128 : i32
    %14 = vector.broadcast %c128_i32 : i32 to vector<8x128xi32>
    %15 = arith.muli %13, %14 : vector<8x128xi32>
    %16 = arith.addi %15, %8 : vector<8x128xi32>
    %c16_i32 = arith.constant 16 : i32
    %17 = vector.broadcast %c16_i32 : i32 to vector<8x128xi32>
    %18 = arith.cmpi slt, %16, %17 : vector<8x128xi32>
    %19 = arith.andi %6, %18 : vector<8x128xi1>
    %cst_4 = arith.constant 0.000000e+00 : f32
    %20 = vector.broadcast %cst_4 : f32 to vector<8x128xf32>
    %21 = arith.maximumf %3, %20 : vector<8x128xf32>
    %22 = arith.mulf %3, %4 : vector<8x128xf32>
    %23 = arith.subf %21, %22 : vector<8x128xf32>
    %24 = math.absf %3 : vector<8x128xf32>
    %cst_5 = arith.constant 0.000000e+00 : f32
    %25 = vector.broadcast %cst_5 : f32 to vector<8x128xf32>
    %26 = arith.subf %25, %24 : vector<8x128xf32>
    %27 = math.exp %26 : vector<8x128xf32>
    %28 = math.log1p %27 : vector<8x128xf32>
    %29 = arith.addf %23, %28 : vector<8x128xf32>
    %cst_6 = arith.constant 0.000000e+00 : f32
    %30 = vector.broadcast %cst_6 : f32 to vector<8x128xf32>
    %31 = arith.select %19, %29, %30 : vector<8x128xi1>, vector<8x128xf32>
    %32 = arith.extui %19 : vector<8x128xi1> to vector<8x128xi32>
    %33 = arith.sitofp %32 : vector<8x128xi32> to vector<8x128xf32>
    %c0_7 = arith.constant 0 : index
    %c0_8 = arith.constant 0 : index
    %34 = vector.load %arg5[%c0_7, %c0_8] : memref<8x128xf32, #tpu.memory_space<vmem>>, vector<8x128xf32>
    %35 = vector.shape_cast %31 : vector<8x128xf32> to vector<1x8x128xf32>
    %cst_9 = arith.constant dense<0.000000e+00> : vector<8x128xf32>
    %36 = vector.multi_reduction <add>, %35, %cst_9 [0] : vector<1x8x128xf32> to vector<8x128xf32>
    %37 = arith.addf %34, %36 : vector<8x128xf32>
    %c0_10 = arith.constant 0 : index
    %c0_11 = arith.constant 0 : index
    %38 = vector.load %arg5[%c0_10, %c0_11] : memref<8x128xf32, #tpu.memory_space<vmem>>, vector<8x128xf32>
    tpu.vector_store %arg5[%c0_10, %c0_11], %37 {strides = array<i32>} : memref<8x128xf32, #tpu.memory_space<vmem>>, vector<8x128xf32>,
    %c0_12 = arith.constant 0 : index
    %c0_13 = arith.constant 0 : index
    %39 = vector.load %arg6[%c0_12, %c0_13] : memref<8x128xf32, #tpu.memory_space<vmem>>, vector<8x128xf32>
    %40 = vector.shape_cast %33 : vector<8x128xf32> to vector<1x8x128xf32>
    %cst_14 = arith.constant dense<0.000000e+00> : vector<8x128xf32>
    %41 = vector.multi_reduction <add>, %40, %cst_14 [0] : vector<1x8x128xf32> to vector<8x128xf32>
    %42 = arith.addf %39, %41 : vector<8x128xf32>
    %c0_15 = arith.constant 0 : index
    %c0_16 = arith.constant 0 : index
    %43 = vector.load %arg6[%c0_15, %c0_16] : memref<8x128xf32, #tpu.memory_space<vmem>>, vector<8x128xf32>
    tpu.vector_store %arg6[%c0_15, %c0_16], %42 {strides = array<i32>} : memref<8x128xf32, #tpu.memory_space<vmem>>, vector<8x128xf32>,
    %c0_i32_17 = arith.constant 0 : i32
    %44 = arith.cmpi eq, %arg1, %c0_i32_17 : i32
    %45 = arith.extui %44 : i1 to i32
    %c0_i32_18 = arith.constant 0 : i32
    %46 = arith.cmpi ne, %45, %c0_i32_18 : i32
    scf.if %46 {
      %c0_19 = arith.constant 0 : index
      %c0_20 = arith.constant 0 : index
      %47 = vector.load %arg5[%c0_19, %c0_20] : memref<8x128xf32, #tpu.memory_space<vmem>>, vector<8x128xf32>
      %c0_21 = arith.constant 0 : index
      %c0_22 = arith.constant 0 : index
      %c0_23 = arith.constant 0 : index
      %c0_24 = arith.constant 0 : index
      %48 = vector.load %arg4[%c0_21, %c0_22, %c0_23, %c0_24] : memref<1x2x8x128xf32, #tpu.memory_space<vmem>>, vector<1x1x8x128xf32>
      %49 = vector.shape_cast %48 : vector<1x1x8x128xf32> to vector<8x128xf32>
      %50 = vector.shape_cast %47 : vector<8x128xf32> to vector<1x1x8x128xf32>
      tpu.vector_store %arg4[%c0_21, %c0_22, %c0_23, %c0_24], %50 {strides = array<i32>} : memref<1x2x8x128xf32, #tpu.memory_space<vmem>>, vector<1x1x8x128xf32>,
      %c0_25 = arith.constant 0 : index
      %c0_26 = arith.constant 0 : index
      %51 = vector.load %arg6[%c0_25, %c0_26] : memref<8x128xf32, #tpu.memory_space<vmem>>, vector<8x128xf32>
      %c0_27 = arith.constant 0 : index
      %c1 = arith.constant 1 : index
      %c0_28 = arith.constant 0 : index
      %c0_29 = arith.constant 0 : index
      %52 = vector.load %arg4[%c0_27, %c1, %c0_28, %c0_29] : memref<1x2x8x128xf32, #tpu.memory_space<vmem>>, vector<1x1x8x128xf32>
      %53 = vector.shape_cast %52 : vector<1x1x8x128xf32> to vector<8x128xf32>
      %54 = vector.shape_cast %51 : vector<8x128xf32> to vector<1x1x8x128xf32>
      tpu.vector_store %arg4[%c0_27, %c1, %c0_28, %c0_29], %54 {strides = array<i32>} : memref<1x2x8x128xf32, #tpu.memory_space<vmem>>, vector<1x1x8x128xf32>,
    } else {
    }
    return
  }
  func.func @transform_0(%arg0: i32, %arg1: i32) -> (i32, i32) {
    %c1_i32 = arith.constant 1 : i32
    %0 = arith.muli %arg0, %c1_i32 : i32
    %1 = arith.addi %0, %arg1 : i32
    %c0_i32 = arith.constant 0 : i32
    %2 = arith.minsi %1, %c0_i32 : i32
    %c0_i32_0 = arith.constant 0 : i32
    %c0_i32_1 = arith.constant 0 : i32
    return %2, %c0_i32_0 : i32, i32
  }
  func.func @transform_1(%arg0: i32, %arg1: i32) -> (i32, i32) {
    %c1_i32 = arith.constant 1 : i32
    %0 = arith.muli %arg0, %c1_i32 : i32
    %1 = arith.addi %0, %arg1 : i32
    %c0_i32 = arith.constant 0 : i32
    %2 = arith.minsi %1, %c0_i32 : i32
    %c0_i32_0 = arith.constant 0 : i32
    %c0_i32_1 = arith.constant 0 : i32
    return %2, %c0_i32_0 : i32, i32
  }
  func.func @transform_2(%arg0: i32, %arg1: i32) -> (i32, i32, i32, i32) {
    %c0_i32 = arith.constant 0 : i32
    %c0_i32_0 = arith.constant 0 : i32
    %c0_i32_1 = arith.constant 0 : i32
    %c0_i32_2 = arith.constant 0 : i32
    return %arg0, %c0_i32, %c0_i32_0, %c0_i32_1 : i32, i32, i32, i32
  }
}

</mosaic_0001>

<llo_original>
// kernel: bce_loss_for_token_classification.1
$region0: #{bce_loss_for_token_classification.1}
  #allocation0 [shape = 'u32[]', space=smem, size = 0x4, offset = 0x4, fixed_abs, tag = 'smem constant byte address 0x4 - core index']
  #allocation1 [shape = 'u32[72,128]{1,0:T(1,128)}', space=vmem, size = 0x9000, scoped, tag = 'internal scratch']
  #allocation2 [shape = 'f32[8,128]{1,0:T(8,128)}', space=vmem, size = 0x1000, scoped, tag = 'scratch operand']
  #allocation3 [shape = 'f32[8,128]{1,0:T(8,128)}', space=vmem, size = 0x1000, scoped, tag = 'scratch operand']
  %s0 = inlined_call_operand.vmem [shape: f32[8,128], index: 0, kind: input, shape index: {}]
  %s1 = inlined_call_operand.vmem [shape: f32[8,128], index: 1, kind: input, shape index: {}]
  %s2 = inlined_call_operand.vmem [shape: f32[1,2,8,128], index: 2, kind: output, shape index: {}]
  %s3 = sld [smem:[#allocation0]]
  $region26: #{bce_loss_for_token_classification.1} parent=0
    _
  %s5 = ssub.s32 1, %s3
  %s6 = scalar_select 0, %s5, %s3
  // Predicated region
  $region2: #{bce_loss_for_token_classification.1} parent=0 // pred_check
    _
  $region3: #{bce_loss_for_token_classification.1} parent=0 // pred_check_branch
    %8 = sbr.rel (0) target = $region5
  $region4: #{bce_loss_for_token_classification.1} parent=0 // pred_region
    %s9 = sadd.s32 0, 0
    %p10 = scmp.lt.s32.totalorder %s9, 0
    %s11 = scalar_select %p10, %s9, 0
    %p12 = scmp.lt.s32.totalorder %s11, 0
    %s13 = scalar_select %p12, %s11, 0
    %s14 = smul.addr %s13, 8
    %s15 = scalar_lea.vmem %s0, %s14
    %s16 = sadd.s32 0, 0
    %p17 = scmp.lt.s32.totalorder %s16, 0
    %s18 = scalar_select %p17, %s16, 0
  $region5: #{bce_loss_for_token_classification.1} parent=0 // pred_fallthru
    _
  // Predicated region
  $region6: #{bce_loss_for_token_classification.1} parent=0 // pred_check
    _
  $region7: #{bce_loss_for_token_classification.1} parent=0 // pred_check_branch
    %20 = sbr.rel (0) target = $region9
  $region8: #{bce_loss_for_token_classification.1} parent=0 // pred_region
    %s21 = sadd.s32 0, 0
    %p22 = scmp.lt.s32.totalorder %s21, 0
    %s23 = scalar_select %p22, %s21, 0
    %p24 = scmp.lt.s32.totalorder %s23, 0
    %s25 = scalar_select %p24, %s23, 0
    %s26 = smul.addr %s25, 8
    %s27 = scalar_lea.vmem %s1, %s26
    %s28 = sadd.s32 0, 0
    %p29 = scmp.lt.s32.totalorder %s28, 0
    %s30 = scalar_select %p29, %s28, 0
  $region9: #{bce_loss_for_token_classification.1} parent=0 // pred_fallthru
    _
  %s31 = sadd.s32 0, 0
  %p32 = scmp.lt.s32.totalorder %s31, 0
  %s33 = scalar_select %p32, %s31, 0
  %p34 = scmp.lt.s32.totalorder %s33, 0
  %s35 = scalar_select %p34, %s33, 0
  %s36 = smul.addr %s35, 8
  %s37 = scalar_lea.vmem %s0, %s36
  %s38 = sadd.s32 0, 0
  %p39 = scmp.lt.s32.totalorder %s38, 0
  %s40 = scalar_select %p39, %s38, 0
  %p41 = scmp.lt.s32.totalorder %s40, 0
  %s42 = scalar_select %p41, %s40, 0
  %s43 = smul.addr %s42, 8
  %s44 = scalar_lea.vmem %s1, %s43
  %s45 = sadd.s32 0, 0
  %p46 = scmp.lt.s32.totalorder %s45, 0
  %s47 = scalar_select %p46, %s45, 0
  %p48 = scmp.lt.s32.totalorder %s47, 0
  %s49 = scalar_select %p48, %s47, 0
  %s50 = smul.addr %s49, 8
  %s51 = scalar_lea.vmem %s0, %s50
  %s52 = sadd.s32 0, 0
  %p53 = scmp.lt.s32.totalorder %s52, 0
  %s54 = scalar_select %p53, %s52, 0
  %s55 = sadd.s32 0, 0
  %p56 = scmp.lt.s32.totalorder %s55, 0
  %s57 = scalar_select %p56, %s55, 0
  %p58 = scmp.lt.s32.totalorder %s57, 0
  %s59 = scalar_select %p58, %s57, 0
  %s60 = smul.addr %s59, 8
  %s61 = scalar_lea.vmem %s1, %s60
  %s62 = sadd.s32 0, 0
  %p63 = scmp.lt.s32.totalorder %s62, 0
  %s64 = scalar_select %p63, %s62, 0
  %p65 = scmp.eq.s32.totalorder 0, 0
  // Predicated region
  $region10: #{bce_loss_for_token_classification.1} parent=0 // pred_check
    %p66 = pneg %p65
  $region11: #{bce_loss_for_token_classification.1} parent=0 // pred_check_branch
    %68 = sbr.rel (%p66) target = $region13
  $region12: #{bce_loss_for_token_classification.1} parent=0 // pred_region
    %69 = vst [vmem:[#allocation2] sm:$0xff] 0.0
    %70 = vst [vmem:[#allocation3] sm:$0xff] 0.0
  $region13: #{bce_loss_for_token_classification.1} parent=0 // pred_fallthru
    _
  %v71 = vld [vmem:[%s51] sm:$0xff]
  %v72 = vld [vmem:[%s61] sm:$0xff]
  %vm73 = vcmp.ge.f32.partialorder %v72, 0.0
  %v74 = vlaneseq
  %v75 = vshrl.u32 %v74, 7
  %v76 = vlaneseq
  %v77 = vand.u32 %v76, 127
  %s78 = sadd.s32 0, 0
  %s79 = smul.u32 %s78, 8
  %v80 = vstv %s79
  %v81 = vadd.s32 %v80, %v75
  %v82 = vmul.u32 %v81, 128
  %v83 = vadd.s32 %v82, %v77
  %vm84 = vcmp.lt.s32.totalorder %v83, 16
  %vm85 = vmand %vm73, %vm84
  %v86 = vmax.f32 %v71, 0.0
  %v87 = vmul.f32 %v71, %v72
  %v88 = vsub.f32 %v86, %v87
  %v89 = vand.u32 2147483647, %v71
  %v90 = vsub.f32 0.0, %v89
  %v91 = vmul.f32 %v90, 1.442695
  %v92 = vpow.pop %v91
  %v93 = vadd.f32 %v92, 1.0
  %v94 = vlog2.pop %v93
  %v95 = vmul.f32 %v94, 0.6931472
  %v96 = vmul.f32 -0.5, %v92
  %v97 = vadd.f32 %v96, 1.0
  %v98 = vmul.f32 %v97, %v92
  %v99 = vand.u32 2147483647, %v92
  %vm100 = vcmp.lt.f32.partialorder %v99, 0.0004427343
  %v101 = vsel %vm100, %v98, %v95
  %v102 = vadd.f32 %v88, %v101
  %v103 = vsel %vm85, %v102, 0.0
  %v104 = vsel %vm85, 1, 0
  %v105 = vcvt.s32.f32 %v104
  %v106 = vld [vmem:[#allocation2] sm:$0xff]
  %v107 = vadd.f32 %v103, 0.0
  %v108 = vadd.f32 %v106, %v107
  %109 = vst [vmem:[#allocation2] sm:$0xff] %v108
  %v110 = vld [vmem:[#allocation3] sm:$0xff]
  %v111 = vadd.f32 %v105, 0.0
  %v112 = vadd.f32 %v110, %v111
  %113 = vst [vmem:[#allocation3] sm:$0xff] %v112
  // Predicated region
  $region14: #{bce_loss_for_token_classification.1} parent=0 // pred_check
    %p114 = pneg %p65
  $region15: #{bce_loss_for_token_classification.1} parent=0 // pred_check_branch
    %116 = sbr.rel (%p114) target = $region17
  $region16: #{bce_loss_for_token_classification.1} parent=0 // pred_region
    %v117 = vld [vmem:[#allocation2] sm:$0xff]
    %118 = vst [vmem:[%s2] sm:$0xff] %v117
    %v119 = vld [vmem:[#allocation3] sm:$0xff]
    %s120 = scalar_lea.vmem %s2, 8
    %121 = vst [vmem:[%s120] sm:$0xff] %v119
  $region17: #{bce_loss_for_token_classification.1} parent=0 // pred_fallthru
    _
  // Predicated region
  $region18: #{bce_loss_for_token_classification.1} parent=0 // pred_check
    _
  $region19: #{bce_loss_for_token_classification.1} parent=0 // pred_check_branch
    %123 = sbr.rel (0) target = $region21
  $region20: #{bce_loss_for_token_classification.1} parent=0 // pred_region
    _
  $region21: #{bce_loss_for_token_classification.1} parent=0 // pred_fallthru
    _
  // Predicated region
  $region22: #{bce_loss_for_token_classification.1} parent=0 // pred_check
    _
  $region23: #{bce_loss_for_token_classification.1} parent=0 // pred_check_branch
    %125 = sbr.rel (0) target = $region25
  $region24: #{bce_loss_for_token_classification.1} parent=0 // pred_region
    _
  $region25: #{bce_loss_for_token_classification.1} parent=0 // pred_fallthru
    _

</llo_original>
